<compile_context>
chip_gen: v5e
topology: v5e:2x2
jax: 0.10.0
libtpu: 0.0.40
codegen_flags: <defaults>
</compile_context>

<pallas_src>
import functools

import jax
import jax.numpy as jnp
from jax.experimental import pallas as pl
from jax.experimental.pallas import tpu as pltpu


def _round_up(x: int, m: int) -> int:
    return ((x + m - 1) // m) * m


def _nn_kernel(x_ref, w1_ref, b1_ref, w2_ref, b2_ref, o_ref, *, compute_dtype):
    # x arrives as f32; cast (if requested) on the VPU, hidden under the DMA.
    x = x_ref[...].astype(compute_dtype)

    # --- lin1 + ReLU: MXU matmul (f32 accumulate) + VPU elementwise in f32 ---
    h = jnp.dot(x, w1_ref[...], preferred_element_type=jnp.float32)
    h = jnp.maximum(h + b1_ref[...], 0.0)

    # --- lin2 ---
    z = jnp.dot(h.astype(w2_ref.dtype), w2_ref[...],
                preferred_element_type=jnp.float32)
    z = z + b2_ref[...]

    # --- numerically stable log_softmax over the (narrow) feature axis ---
    m = jnp.max(z, axis=1, keepdims=True)
    shifted = z - m
    lse = jnp.log(jnp.sum(jnp.exp(shifted), axis=1, keepdims=True))
    o_ref[...] = (shifted - lse).astype(o_ref.dtype)


@functools.partial(jax.jit, static_argnames=("tile_n", "compute_dtype"))
def nn_forward(x, adj, w1, b1, w2, b2, *, tile_n=1024, compute_dtype=jnp.float32):
    """Fused MLP + log_softmax.  `adj` is ignored (parity with the torch forward).

    x : (N, in_feat)         w1: (in_feat, hid_feat)   b1: (1, hid_feat)
    w2: (hid_feat, out_feat) b2: (1, out_feat)
    Returns (N, out_feat) float32 log-probabilities.
    """
    del adj
    n, in_feat = x.shape
    hid_feat = w1.shape[1]
    out_feat = w2.shape[1]

    # ---- row tiling ----
    # Sublane packing: bf16 packs 2 rows/sublane -> keep tn a multiple of 16.
    sub = 16 if compute_dtype == jnp.bfloat16 else 8
    tn = _round_up(min(int(tile_n), _round_up(n, sub)), sub)
    # Ensure >= 2 parallel grid steps for larger N so v7x megacore can shard row
    # tiles across both TensorCores; on v5e/v6e this is at most one extra cheap step.
    if n >= 2 * sub:
        tn = min(tn, _round_up(pl.cdiv(n, 2), sub))
    grid = (pl.cdiv(n, tn),)  # partial last block handled by Pallas (writes masked)

    # Weights/biases are tiny and stay VMEM-resident across all row tiles:
    # cast them once in the wrapper.  x stays f32 in HBM (cast inside the kernel).
    w1c = w1.astype(compute_dtype)
    w2c = w2.astype(compute_dtype)
    b1f = b1.astype(jnp.float32)
    b2f = b2.astype(jnp.float32)

    return pl.pallas_call(
        functools.partial(_nn_kernel, compute_dtype=compute_dtype),
        out_shape=jax.ShapeDtypeStruct((n, out_feat), jnp.float32),
        grid_spec=pl.GridSpec(
            grid=grid,
            in_specs=[
                pl.BlockSpec((tn, in_feat), lambda i: (i, 0)),        # x: row tiles
                pl.BlockSpec((in_feat, hid_feat), lambda i: (0, 0)),  # w1: resident
                pl.BlockSpec((1, hid_feat), lambda i: (0, 0)),        # b1: resident
                pl.BlockSpec((hid_feat, out_feat), lambda i: (0, 0)), # w2: resident
                pl.BlockSpec((1, out_feat), lambda i: (0, 0)),        # b2: resident
            ],
            out_specs=pl.BlockSpec((tn, out_feat), lambda i: (i, 0)),  # narrow store
        ),
        compiler_params=pltpu.CompilerParams(
            dimension_semantics=("parallel",),   # independent row tiles -> v7x 2-TC
        ),
    )(x, w1c, b1f, w2c, b2f)


def init_params(key, in_feat, hid_feat, out_feat):
    """Deterministic init mimicking torch.nn.Linear default (uniform +/- 1/sqrt(fan_in))."""
    k1, k2, k3, k4 = jax.random.split(key, 4)
    bound1 = 1.0 / jnp.sqrt(in_feat)
    bound2 = 1.0 / jnp.sqrt(hid_feat)
    w1 = jax.random.uniform(k1, (in_feat, hid_feat), jnp.float32, -bound1, bound1)
    b1 = jax.random.uniform(k2, (1, hid_feat), jnp.float32, -bound1, bound1)
    w2 = jax.random.uniform(k3, (hid_feat, out_feat), jnp.float32, -bound2, bound2)
    b2 = jax.random.uniform(k4, (1, out_feat), jnp.float32, -bound2, bound2)
    return w1, b1, w2, b2


def _reference(x, w1, b1, w2, b2):
    h = jnp.maximum(x @ w1 + b1, 0.0)
    z = h @ w2 + b2
    return jax.nn.log_softmax(z, axis=1)


if __name__ == "__main__":
    in_feat, hid_feat, out_feat = 32, 64, 16
    batch = 8

    key = jax.random.PRNGKey(0)
    kx, kp, ka, kx2 = jax.random.split(key, 4)
    x = jax.random.normal(kx, (batch, in_feat), jnp.float32)
    adj = jax.random.normal(ka, (batch, batch), jnp.float32)  # unused, API parity
    w1, b1, w2, b2 = init_params(kp, in_feat, hid_feat, out_feat)

    # --- 1) small batch, f32 matmul path (tight tolerance), single grid step ---
    out = jax.block_until_ready(nn_forward(x, adj, w1, b1, w2, b2))
    ref = _reference(x, w1, b1, w2, b2)
    assert out.shape == (batch, out_feat)
    assert jnp.allclose(out, ref, atol=1e-5, rtol=1e-5)

    # --- 2) larger batch exercising row tiling + partial last block (grid > 1) ---
    batch2 = 200
    x2 = jax.random.normal(kx2, (batch2, in_feat), jnp.float32)
    adj2 = jnp.zeros((batch2, batch2), jnp.float32)
    out2 = jax.block_until_ready(
        nn_forward(x2, adj2, w1, b1, w2, b2, tile_n=64))
    ref2 = _reference(x2, w1, b1, w2, b2)
    assert out2.shape == (batch2, out_feat)
    assert jnp.allclose(out2, ref2, atol=1e-5, rtol=1e-5)

    # --- 3) default (large) tile with the >=2-step cap for v7x megacore ---
    out2b = jax.block_until_ready(nn_forward(x2, adj2, w1, b1, w2, b2))
    assert jnp.allclose(out2b, ref2, atol=1e-5, rtol=1e-5)

    # --- 4) bf16 matmul-input path (f32 accumulate, in-kernel x cast) ---
    out3 = jax.block_until_ready(
        nn_forward(x2, adj2, w1, b1, w2, b2, tile_n=64,
                   compute_dtype=jnp.bfloat16))
    assert jnp.allclose(out3, ref2, atol=3e-2, rtol=3e-2)

    print("KERNEL_OK")
</pallas_src>

<mosaic_0001>
module attributes {stable_mosaic.version = 11 : i64} {
  func.func @_nn_kernel(%arg0: i32, %arg1: memref<8x32xf32, #tpu.memory_space<vmem>>, %arg2: memref<32x64xf32, #tpu.memory_space<vmem>>, %arg3: memref<1x64xf32, #tpu.memory_space<vmem>>, %arg4: memref<64x16xf32, #tpu.memory_space<vmem>>, %arg5: memref<1x16xf32, #tpu.memory_space<vmem>>, %arg6: memref<8x16xf32, #tpu.memory_space<vmem>>) attributes {dimension_semantics = [#tpu.dimension_semantics<parallel>], iteration_bounds = array<i64: 1>, scalar_prefetch = 0 : i64, scratch_operands = 0 : i64, tpu.core_type = #tpu.core_type<tc>, window_params = [{transform_indices = @transform_0, window_bounds = array<i64: 8, 32>}, {pipeline_mode = #tpu.pipeline_mode<synchronous>, transform_indices = @transform_1, window_bounds = array<i64: 32, 64>}, {pipeline_mode = #tpu.pipeline_mode<synchronous>, transform_indices = @transform_2, window_bounds = array<i64: 1, 64>}, {pipeline_mode = #tpu.pipeline_mode<synchronous>, transform_indices = @transform_3, window_bounds = array<i64: 64, 16>}, {pipeline_mode = #tpu.pipeline_mode<synchronous>, transform_indices = @transform_4, window_bounds = array<i64: 1, 16>}, {transform_indices = @transform_5, window_bounds = array<i64: 8, 16>}]} {
    %c0 = arith.constant 0 : index
    %c0_0 = arith.constant 0 : index
    %0 = vector.load %arg1[%c0, %c0_0] : memref<8x32xf32, #tpu.memory_space<vmem>>, vector<8x32xf32>
    %c0_1 = arith.constant 0 : index
    %c0_2 = arith.constant 0 : index
    %1 = vector.load %arg2[%c0_1, %c0_2] : memref<32x64xf32, #tpu.memory_space<vmem>>, vector<32x64xf32>
    %cst = arith.constant dense<0.000000e+00> : vector<8x64xf32>
    %2 = tpu.matmul %0, %1, %cst {dimension_numbers = #tpu.dot_dimension_numbers<[1], [0], [0], [1], [0, 0, 1, 1], [], []>} : vector<8x32xf32>, vector<32x64xf32>, vector<8x64xf32> -> vector<8x64xf32>
    %c0_3 = arith.constant 0 : index
    %c0_4 = arith.constant 0 : index
    %3 = vector.load %arg3[%c0_3, %c0_4] : memref<1x64xf32, #tpu.memory_space<vmem>>, vector<1x64xf32>
    %4 = vector.broadcast %3 : vector<1x64xf32> to vector<8x64xf32>
    %5 = arith.addf %2, %4 : vector<8x64xf32>
    %cst_5 = arith.constant 0.000000e+00 : f32
    %6 = vector.broadcast %cst_5 : f32 to vector<8x64xf32>
    %7 = arith.maximumf %5, %6 : vector<8x64xf32>
    %c0_6 = arith.constant 0 : index
    %c0_7 = arith.constant 0 : index
    %8 = vector.load %arg4[%c0_6, %c0_7] : memref<64x16xf32, #tpu.memory_space<vmem>>, vector<64x16xf32>
    %cst_8 = arith.constant dense<0.000000e+00> : vector<8x16xf32>
    %9 = tpu.matmul %7, %8, %cst_8 {dimension_numbers = #tpu.dot_dimension_numbers<[1], [0], [0], [1], [0, 0, 1, 1], [], []>} : vector<8x64xf32>, vector<64x16xf32>, vector<8x16xf32> -> vector<8x16xf32>
    %c0_9 = arith.constant 0 : index
    %c0_10 = arith.constant 0 : index
    %10 = vector.load %arg5[%c0_9, %c0_10] : memref<1x16xf32, #tpu.memory_space<vmem>>, vector<1x16xf32>
    %11 = vector.broadcast %10 : vector<1x16xf32> to vector<8x16xf32>
    %12 = arith.addf %9, %11 : vector<8x16xf32>
    %cst_11 = arith.constant dense<0xFF800000> : vector<8xf32>
    %13 = vector.multi_reduction <maximumf>, %12, %cst_11 [1] : vector<8x16xf32> to vector<8xf32>
    %14 = vector.shape_cast %13 : vector<8xf32> to vector<8x1xf32>
    %15 = vector.broadcast %14 : vector<8x1xf32> to vector<8x16xf32>
    %16 = arith.subf %12, %15 : vector<8x16xf32>
    %17 = math.exp %16 : vector<8x16xf32>
    %cst_12 = arith.constant dense<0.000000e+00> : vector<8xf32>
    %18 = vector.multi_reduction <add>, %17, %cst_12 [1] : vector<8x16xf32> to vector<8xf32>
    %19 = vector.shape_cast %18 : vector<8xf32> to vector<8x1xf32>
    %20 = math.log %19 : vector<8x1xf32>
    %21 = vector.broadcast %20 : vector<8x1xf32> to vector<8x16xf32>
    %22 = arith.subf %16, %21 : vector<8x16xf32>
    %c0_13 = arith.constant 0 : index
    %c0_14 = arith.constant 0 : index
    %23 = vector.load %arg6[%c0_13, %c0_14] : memref<8x16xf32, #tpu.memory_space<vmem>>, vector<8x16xf32>
    tpu.vector_store %arg6[%c0_13, %c0_14], %22 {strides = array<i32>} : memref<8x16xf32, #tpu.memory_space<vmem>>, vector<8x16xf32>,
    return
  }
  func.func @transform_0(%arg0: i32) -> (i32, i32) {
    %c0_i32 = arith.constant 0 : i32
    %c0_i32_0 = arith.constant 0 : i32
    return %arg0, %c0_i32 : i32, i32
  }
  func.func @transform_1(%arg0: i32) -> (i32, i32) {
    %c0_i32 = arith.constant 0 : i32
    %c0_i32_0 = arith.constant 0 : i32
    %c0_i32_1 = arith.constant 0 : i32
    return %c0_i32, %c0_i32_0 : i32, i32
  }
  func.func @transform_2(%arg0: i32) -> (i32, i32) {
    %c0_i32 = arith.constant 0 : i32
    %c0_i32_0 = arith.constant 0 : i32
    %c0_i32_1 = arith.constant 0 : i32
    return %c0_i32, %c0_i32_0 : i32, i32
  }
  func.func @transform_3(%arg0: i32) -> (i32, i32) {
    %c0_i32 = arith.constant 0 : i32
    %c0_i32_0 = arith.constant 0 : i32
    %c0_i32_1 = arith.constant 0 : i32
    return %c0_i32, %c0_i32_0 : i32, i32
  }
  func.func @transform_4(%arg0: i32) -> (i32, i32) {
    %c0_i32 = arith.constant 0 : i32
    %c0_i32_0 = arith.constant 0 : i32
    %c0_i32_1 = arith.constant 0 : i32
    return %c0_i32, %c0_i32_0 : i32, i32
  }
  func.func @transform_5(%arg0: i32) -> (i32, i32) {
    %c0_i32 = arith.constant 0 : i32
    %c0_i32_0 = arith.constant 0 : i32
    return %arg0, %c0_i32 : i32, i32
  }
}

</mosaic_0001>

<llo_original>
// kernel: nn_forward.1
$region0: #{nn_forward.1}
  #allocation0 [shape = 'u32[]', space=smem, size = 0x4, offset = 0x4, fixed_abs, tag = 'smem constant byte address 0x4 - core index']
  #allocation1 [shape = 'u32[72,128]{1,0:T(1,128)}', space=vmem, size = 0x9000, scoped, tag = 'internal scratch']
  %s0 = inlined_call_operand.vmem [shape: f32[8,32], index: 0, kind: input, shape index: {}]
  %s1 = inlined_call_operand.vmem [shape: f32[32,64], index: 1, kind: input, shape index: {}]
  %s2 = inlined_call_operand.vmem [shape: f32[1,64], index: 2, kind: input, shape index: {}]
  %s3 = inlined_call_operand.vmem [shape: f32[64,16], index: 3, kind: input, shape index: {}]
  %s4 = inlined_call_operand.vmem [shape: f32[1,16], index: 4, kind: input, shape index: {}]
  %s5 = inlined_call_operand.hbm [shape: f32[8,16], index: 5, kind: output, shape index: {}]
  %s6 = sld [smem:[#allocation0]]
  $region30: #{nn_forward.1} parent=0
    _
  %s8 = ssub.s32 1, %s6
  %s9 = scalar_select 0, %s8, %s6
  $region1: #{nn_forward.1} parent=0
    #allocation2 [shape = 'u8[4096]{0}', space=vmem, size = 0x1000, scoped, tag = 'output window, operand 0, single buffered']
    #allocation3 [shape = 's32[1]{0}', space=sflag, size = 0x4, scoped, tag = 'scoped memory for nn_forward.1']
    %10 = vsyncpa [#allocation3], 0
    // Predicated region
    $region2: #{nn_forward.1} parent=1 // pred_check
      _
    $region3: #{nn_forward.1} parent=1 // pred_check_branch
      %12 = sbr.rel (0) target = $region5
    $region4: #{nn_forward.1} parent=1 // pred_region
      _
    $region5: #{nn_forward.1} parent=1 // pred_fallthru
      _
    // Predicated region
    $region6: #{nn_forward.1} parent=1 // pred_check
      _
    $region7: #{nn_forward.1} parent=1 // pred_check_branch
      %14 = sbr.rel (0) target = $region9
    $region8: #{nn_forward.1} parent=1 // pred_region
      _
    $region9: #{nn_forward.1} parent=1 // pred_fallthru
      _
    // Predicated region
    $region10: #{nn_forward.1} parent=1 // pred_check
      _
    $region11: #{nn_forward.1} parent=1 // pred_check_branch
      %16 = sbr.rel (0) target = $region13
    $region12: #{nn_forward.1} parent=1 // pred_region
      _
    $region13: #{nn_forward.1} parent=1 // pred_fallthru
      _
    // Predicated region
    $region14: #{nn_forward.1} parent=1 // pred_check
      _
    $region15: #{nn_forward.1} parent=1 // pred_check_branch
      %18 = sbr.rel (0) target = $region17
    $region16: #{nn_forward.1} parent=1 // pred_region
      _
    $region17: #{nn_forward.1} parent=1 // pred_fallthru
      _
    // Predicated region
    $region18: #{nn_forward.1} parent=1 // pred_check
      _
    $region19: #{nn_forward.1} parent=1 // pred_check_branch
      %20 = sbr.rel (0) target = $region21
    $region20: #{nn_forward.1} parent=1 // pred_region
      _
    $region21: #{nn_forward.1} parent=1 // pred_fallthru
      _
    %v21 = vld [vmem:[%s0] sm:$0xff]
    %v22 = vld [vmem:[%s1] sm:$0xff]
    %v23 = vld [vmem:[%s1 + $0x8] sm:$0xff]
    %v24 = vld [vmem:[%s1 + $0x10] sm:$0xff]
    %v25 = vld [vmem:[%s1 + $0x18] sm:$0xff]
    %v26 = vld [vmem:[%s2] sm:$0x1]
    %v28 = vperm.slane %v26, 0
    %vm30 = vcmask 261120
    %v32 = vsel %vm30, %v21, 0
    %34 = vmatpush.msra.mxu0 0.0
    %35 = vmatpush.msra.mxu0 0.0
    %36 = vmatpush.msra.mxu0 0.0
    %37 = vmatpush.msra.mxu0 0.0
    %38 = vmatpush.msra.mxu0 0.0
    %39 = vmatpush.msra.mxu0 0.0
    %40 = vmatpush.msra.mxu0 0.0
    %41 = vmatpush.msra.mxu0 0.0
    %42 = vmatpush.msra.mxu0 0.0
    %43 = vmatpush.msra.mxu0 0.0
    %44 = vmatpush.msra.mxu0 0.0
    %45 = vmatpush.msra.mxu0 0.0
    %46 = vmatpush.msra.mxu0 %v25
    %47 = vmatpush.msra.mxu0 %v24
    %48 = vmatpush.msra.mxu0 %v23
    %49 = vmatpush.msra.mxu0 %v22
    %50 = vmatmul.f32.gmra.mxu0 %v32
    %v51 = vpop.f32.mrf.mxu0
    %v52 = vadd.f32 %v28, %v51
    %53 = vdwg.mxu0
    %v54 = vmax.f32 %v52, 0.0
    %v55 = vld [vmem:[%s3] sm:$0xff]
    %v56 = vld [vmem:[%s3 + $0x8] sm:$0xff]
    %v57 = vld [vmem:[%s3 + $0x10] sm:$0xff]
    %v58 = vld [vmem:[%s3 + $0x18] sm:$0xff]
    %v59 = vld [vmem:[%s3 + $0x20] sm:$0xff]
    %v60 = vld [vmem:[%s3 + $0x28] sm:$0xff]
    %v61 = vld [vmem:[%s3 + $0x30] sm:$0xff]
    %v62 = vld [vmem:[%s3 + $0x38] sm:$0xff]
    %v63 = vld [vmem:[%s4] sm:$0x1]
    %v65 = vperm.slane %v63, 0
    %vm67 = vcmask 523264
    %v69 = vsel %vm67, %v54, 0
    %71 = vmatpush.msra.mxu0 0.0
    %72 = vmatpush.msra.mxu0 0.0
    %73 = vmatpush.msra.mxu0 0.0
    %74 = vmatpush.msra.mxu0 0.0
    %75 = vmatpush.msra.mxu0 0.0
    %76 = vmatpush.msra.mxu0 0.0
    %77 = vmatpush.msra.mxu0 0.0
    %78 = vmatpush.msra.mxu0 0.0
    %79 = vmatpush.msra.mxu0 %v62
    %80 = vmatpush.msra.mxu0 %v61
    %81 = vmatpush.msra.mxu0 %v60
    %82 = vmatpush.msra.mxu0 %v59
    %83 = vmatpush.msra.mxu0 %v58
    %84 = vmatpush.msra.mxu0 %v57
    %85 = vmatpush.msra.mxu0 %v56
    %86 = vmatpush.msra.mxu0 %v55
    %87 = vmatmul.f32.gmra.mxu0 %v69
    %v88 = vpop.f32.mrf.mxu0
    %v89 = vadd.f32 %v65, %v88
    %90 = vdwg.mxu0
    %vm91 = vcmask 130048
    %v92 = vsel %vm91, %v89, -inf
    %93 = vmax.xlane.f32.xlu0 %v92
    %v94 = vpop.xlane.xlu0 %93
    %v95 = vsub.f32 %v89, %v94
    %v96 = vmul.f32 %v95, 1.442695
    %v97 = vpow.pop %v96
    %v98 = vsel %vm91, %v97, 0.0
    %99 = vadd.xlane.f32.xlu0 %v98
    %v100 = vpop.xlane.xlu0 %99
    %v101 = vlog2.pop %v100
    %v102 = vmul.f32 %v101, 0.6931472
    %v103 = vsub.f32 %v95, %v102
    %104 = vst.msk [vmem:[#allocation2] sm:$0xff] %vm91, %v103
    // Predicated region
    $region22: #{nn_forward.1} parent=1 // pred_check
      _
    $region23: #{nn_forward.1} parent=1 // pred_check_branch
      %106 = sbr.rel (0) target = $region25
    $region24: #{nn_forward.1} parent=1 // pred_region
      %108 = vsyncadd [#allocation3], 0
      %s110 = sshll.u32 [#allocation2], 4
      %s111 = int_to_ptr.vmem [resolvable:$true] %s110
      %s112 = sshll.u32 %s5, 4
      %s113 = int_to_ptr.hbm [resolvable:$true] %s112
      %115 = dma.vmem_to_hbm [thread:$0]  %s111, 128, %s113, [#allocation3]
    $region25: #{nn_forward.1} parent=1 // pred_fallthru
      _
    // Predicated region
    $region26: #{nn_forward.1} parent=1 // pred_check
      _
    $region27: #{nn_forward.1} parent=1 // pred_check_branch
      %117 = sbr.rel (0) target = $region29
    $region28: #{nn_forward.1} parent=1 // pred_region
      %119 = dma.done [#allocation3], 128
    $region29: #{nn_forward.1} parent=1 // pred_fallthru
      _
    %120 = vsyncpa [#allocation3], 1

</llo_original>
